<compile_context>
chip_gen: v6e
topology: v6e:2x2x1
jax: 0.10.0
libtpu: 0.0.40
codegen_flags: <defaults>
</compile_context>

<pallas_src>
import functools

import jax
import jax.numpy as jnp
from jax import lax
from jax.experimental import pallas as pl
from jax.experimental.pallas import tpu as pltpu


def _residual_conv_kernel(x_ref, w_ref, b_ref, row_ref, col_ref, o_ref, *, H, W):
    # x_ref:   (Cin,  H*W)    one image's activations, NCHW flattened (lanes = H*W)
    # w_ref:   (9, Cout, Cin) conv weights, tap-major (tap = ky*3 + kx)
    # b_ref:   (Cout, 1)      conv bias (broadcasts along H*W lanes)
    # row_ref: (1, H*W)       int32 row index of each flattened position
    # col_ref: (1, H*W)       int32 col index of each flattened position
    # o_ref:   (Cout, H*W)    output tile (lane-dense stores)
    HW = H * W
    x = x_ref[...].astype(jnp.float32)   # residual tap + conv RHS source
    row = row_ref[...]
    col = col_ref[...]

    c_out = o_ref.shape[0]
    acc = jnp.zeros((c_out, HW), dtype=jnp.float32)

    # 3x3 conv (padding=1) as 9 accumulating MXU dots on shifted views of the
    # single resident x tile: a spatial shift of (dy, dx) is a lane rotation
    # by dy*W + dx of the flattened tile plus a boundary mask.
    # (On v6e/v7x the two dot operands could additionally be cast to bf16 for
    #  a further footprint cut; kept f32 here for exact parity with the ref.)
    for ky in range(3):
        for kx in range(3):
            dy, dx = ky - 1, kx - 1
            d = dy * W + dx
            if d == 0:
                tap_in = x
            else:
                shifted = pltpu.roll(x, shift=(-d) % HW, axis=1)
                conds = []
                if dy == -1:
                    conds.append(row >= 1)
                elif dy == 1:
                    conds.append(row < H - 1)
                if dx == -1:
                    conds.append(col >= 1)
                elif dx == 1:
                    conds.append(col < W - 1)
                valid = conds[0]
                for c in conds[1:]:
                    valid = valid & c
                tap_in = jnp.where(valid, shifted, 0.0)
            w_tap = w_ref[ky * 3 + kx].astype(jnp.float32)   # (Cout, Cin)
            acc = acc + jnp.dot(w_tap, tap_in,
                                preferred_element_type=jnp.float32)

    out = x + b_ref[...].astype(jnp.float32) + acc           # residual + bias + conv
    o_ref[...] = out.astype(o_ref.dtype)


def residual_conv_pallas(x_nchw, weight_oihw, bias):
    """y = x + Conv2d(C, C, 3, padding=1)(x); NCHW in / NCHW out."""
    N, C, H, W = x_nchw.shape
    c_out, c_in, kh, kw = weight_oihw.shape
    assert c_out == C and c_in == C and (kh, kw) == (3, 3)
    HW = H * W

    # Glue (cheap, layout-preserving): NCHW -> (N, C, H*W) is a free reshape;
    # weights become tap-major; bias becomes a column; two tiny int32 index
    # vectors drive the in-kernel boundary masks.
    x_flat = x_nchw.reshape(N, C, HW)
    w_taps = jnp.transpose(weight_oihw, (2, 3, 0, 1)).reshape(9, c_out, c_in)
    b_col = bias.reshape(c_out, 1)
    pos = jnp.arange(HW, dtype=jnp.int32)
    row_ids = (pos // W).reshape(1, HW)
    col_ids = (pos % W).reshape(1, HW)

    kernel = functools.partial(_residual_conv_kernel, H=H, W=W)

    out_flat = pl.pallas_call(
        kernel,
        out_shape=jax.ShapeDtypeStruct((N, C, HW), x_nchw.dtype),
        grid_spec=pltpu.PrefetchScalarGridSpec(
            num_scalar_prefetch=0,
            grid=(N,),
            in_specs=[
                pl.BlockSpec((None, C, HW), lambda n: (n, 0, 0)),     # x tile
                pl.BlockSpec((9, c_out, c_in), lambda n: (0, 0, 0)),  # weights
                pl.BlockSpec((c_out, 1), lambda n: (0, 0)),           # bias
                pl.BlockSpec((1, HW), lambda n: (0, 0)),              # row ids
                pl.BlockSpec((1, HW), lambda n: (0, 0)),              # col ids
            ],
            out_specs=pl.BlockSpec((None, C, HW), lambda n: (n, 0, 0)),
        ),
        compiler_params=pltpu.CompilerParams(
            dimension_semantics=("parallel",),
        ),
    )(x_flat, w_taps, b_col, row_ids, col_ids)

    return out_flat.reshape(N, C, H, W)


def _reference(x_nchw, weight_oihw, bias):
    conv = lax.conv_general_dilated(
        x_nchw, weight_oihw,
        window_strides=(1, 1), padding=((1, 1), (1, 1)),
        dimension_numbers=("NCHW", "OIHW", "NCHW"),
    ) + bias.reshape(1, -1, 1, 1)
    return x_nchw + conv


if __name__ == "__main__":
    key = jax.random.PRNGKey(0)
    kx, kw, kb = jax.random.split(key, 3)

    N, C, H, W = 2, 4, 16, 16
    x = jax.random.normal(kx, (N, C, H, W), dtype=jnp.float32)

    # Deterministic parameter init for the wrapped Conv2d(C, C, 3, padding=1)
    fan_in = C * 3 * 3
    weight = jax.random.uniform(
        kw, (C, C, 3, 3), minval=-1.0, maxval=1.0, dtype=jnp.float32
    ) / jnp.sqrt(fan_in)
    bias = jax.random.uniform(
        kb, (C,), minval=-1.0, maxval=1.0, dtype=jnp.float32
    ) / jnp.sqrt(fan_in)

    y = residual_conv_pallas(x, weight, bias)
    y = jax.block_until_ready(y)

    y_ref = _reference(x, weight, bias)
    assert y.shape == (N, C, H, W)
    assert jnp.allclose(y, y_ref, atol=1e-4, rtol=1e-4), "mismatch vs reference"

    print("KERNEL_OK")
</pallas_src>

<mosaic_0001>
module attributes {stable_mosaic.version = 11 : i64} {
  func.func @_residual_conv_kernel(%arg0: i32, %arg1: memref<1x4x256xf32, #tpu.memory_space<vmem>>, %arg2: memref<9x4x4xf32, #tpu.memory_space<vmem>>, %arg3: memref<4x1xf32, #tpu.memory_space<vmem>>, %arg4: memref<1x256xi32, #tpu.memory_space<vmem>>, %arg5: memref<1x256xi32, #tpu.memory_space<vmem>>, %arg6: memref<1x4x256xf32, #tpu.memory_space<vmem>>) attributes {dimension_semantics = [#tpu.dimension_semantics<parallel>], iteration_bounds = array<i64: 2>, scalar_prefetch = 0 : i64, scratch_operands = 0 : i64, tpu.core_type = #tpu.core_type<tc>, window_params = [{transform_indices = @transform_0, window_bounds = array<i64: 1, 4, 256>}, {pipeline_mode = #tpu.pipeline_mode<synchronous>, transform_indices = @transform_1, window_bounds = array<i64: 9, 4, 4>}, {pipeline_mode = #tpu.pipeline_mode<synchronous>, transform_indices = @transform_2, window_bounds = array<i64: 4, 1>}, {pipeline_mode = #tpu.pipeline_mode<synchronous>, transform_indices = @transform_3, window_bounds = array<i64: 1, 256>}, {pipeline_mode = #tpu.pipeline_mode<synchronous>, transform_indices = @transform_4, window_bounds = array<i64: 1, 256>}, {transform_indices = @transform_5, window_bounds = array<i64: 1, 4, 256>}]} {
    %c0 = arith.constant 0 : index
    %c0_0 = arith.constant 0 : index
    %c0_1 = arith.constant 0 : index
    %0 = vector.load %arg1[%c0, %c0_0, %c0_1] : memref<1x4x256xf32, #tpu.memory_space<vmem>>, vector<1x4x256xf32>
    %1 = vector.shape_cast %0 : vector<1x4x256xf32> to vector<4x256xf32>
    %c0_2 = arith.constant 0 : index
    %c0_3 = arith.constant 0 : index
    %2 = vector.load %arg4[%c0_2, %c0_3] : memref<1x256xi32, #tpu.memory_space<vmem>>, vector<1x256xi32>
    %c0_4 = arith.constant 0 : index
    %c0_5 = arith.constant 0 : index
    %3 = vector.load %arg5[%c0_4, %c0_5] : memref<1x256xi32, #tpu.memory_space<vmem>>, vector<1x256xi32>
    %cst = arith.constant 0.000000e+00 : f32
    %4 = vector.broadcast %cst : f32 to vector<4x256xf32>
    %c17_i32 = arith.constant 17 : i32
    %5 = tpu.dynamic_rotate %1 by %c17_i32 dim 1 : vector<4x256xf32>, i32 -> vector<4x256xf32>
    %c1_i32 = arith.constant 1 : i32
    %6 = vector.broadcast %c1_i32 : i32 to vector<1x256xi32>
    %7 = arith.cmpi sge, %2, %6 : vector<1x256xi32>
    %c1_i32_6 = arith.constant 1 : i32
    %8 = vector.broadcast %c1_i32_6 : i32 to vector<1x256xi32>
    %9 = arith.cmpi sge, %3, %8 : vector<1x256xi32>
    %10 = arith.andi %7, %9 : vector<1x256xi1>
    %cst_7 = arith.constant 0.000000e+00 : f32
    %11 = vector.shape_cast %10 : vector<1x256xi1> to vector<1x256xi1>
    %12 = vector.broadcast %11 : vector<1x256xi1> to vector<4x256xi1>
    %13 = vector.broadcast %cst_7 : f32 to vector<4x256xf32>
    %14 = arith.select %12, %5, %13 : vector<4x256xi1>, vector<4x256xf32>
    %c0_8 = arith.constant 0 : index
    %c0_9 = arith.constant 0 : index
    %c0_10 = arith.constant 0 : index
    %15 = vector.load %arg2[%c0_8, %c0_9, %c0_10] : memref<9x4x4xf32, #tpu.memory_space<vmem>>, vector<1x4x4xf32>
    %16 = vector.shape_cast %15 : vector<1x4x4xf32> to vector<4x4xf32>
    %cst_11 = arith.constant dense<0.000000e+00> : vector<4x256xf32>
    %17 = tpu.matmul %16, %14, %cst_11 {dimension_numbers = #tpu.dot_dimension_numbers<[1], [0], [0], [1], [0, 0, 1, 1], [], []>} : vector<4x4xf32>, vector<4x256xf32>, vector<4x256xf32> -> vector<4x256xf32>
    %18 = arith.addf %4, %17 : vector<4x256xf32>
    %c16_i32 = arith.constant 16 : i32
    %19 = tpu.dynamic_rotate %1 by %c16_i32 dim 1 : vector<4x256xf32>, i32 -> vector<4x256xf32>
    %c1_i32_12 = arith.constant 1 : i32
    %20 = vector.broadcast %c1_i32_12 : i32 to vector<1x256xi32>
    %21 = arith.cmpi sge, %2, %20 : vector<1x256xi32>
    %cst_13 = arith.constant 0.000000e+00 : f32
    %22 = vector.shape_cast %21 : vector<1x256xi1> to vector<1x256xi1>
    %23 = vector.broadcast %22 : vector<1x256xi1> to vector<4x256xi1>
    %24 = vector.broadcast %cst_13 : f32 to vector<4x256xf32>
    %25 = arith.select %23, %19, %24 : vector<4x256xi1>, vector<4x256xf32>
    %c1 = arith.constant 1 : index
    %c0_14 = arith.constant 0 : index
    %c0_15 = arith.constant 0 : index
    %26 = vector.load %arg2[%c1, %c0_14, %c0_15] : memref<9x4x4xf32, #tpu.memory_space<vmem>>, vector<1x4x4xf32>
    %27 = vector.shape_cast %26 : vector<1x4x4xf32> to vector<4x4xf32>
    %cst_16 = arith.constant dense<0.000000e+00> : vector<4x256xf32>
    %28 = tpu.matmul %27, %25, %cst_16 {dimension_numbers = #tpu.dot_dimension_numbers<[1], [0], [0], [1], [0, 0, 1, 1], [], []>} : vector<4x4xf32>, vector<4x256xf32>, vector<4x256xf32> -> vector<4x256xf32>
    %29 = arith.addf %18, %28 : vector<4x256xf32>
    %c15_i32 = arith.constant 15 : i32
    %30 = tpu.dynamic_rotate %1 by %c15_i32 dim 1 : vector<4x256xf32>, i32 -> vector<4x256xf32>
    %c1_i32_17 = arith.constant 1 : i32
    %31 = vector.broadcast %c1_i32_17 : i32 to vector<1x256xi32>
    %32 = arith.cmpi sge, %2, %31 : vector<1x256xi32>
    %c15_i32_18 = arith.constant 15 : i32
    %33 = vector.broadcast %c15_i32_18 : i32 to vector<1x256xi32>
    %34 = arith.cmpi slt, %3, %33 : vector<1x256xi32>
    %35 = arith.andi %32, %34 : vector<1x256xi1>
    %cst_19 = arith.constant 0.000000e+00 : f32
    %36 = vector.shape_cast %35 : vector<1x256xi1> to vector<1x256xi1>
    %37 = vector.broadcast %36 : vector<1x256xi1> to vector<4x256xi1>
    %38 = vector.broadcast %cst_19 : f32 to vector<4x256xf32>
    %39 = arith.select %37, %30, %38 : vector<4x256xi1>, vector<4x256xf32>
    %c2 = arith.constant 2 : index
    %c0_20 = arith.constant 0 : index
    %c0_21 = arith.constant 0 : index
    %40 = vector.load %arg2[%c2, %c0_20, %c0_21] : memref<9x4x4xf32, #tpu.memory_space<vmem>>, vector<1x4x4xf32>
    %41 = vector.shape_cast %40 : vector<1x4x4xf32> to vector<4x4xf32>
    %cst_22 = arith.constant dense<0.000000e+00> : vector<4x256xf32>
    %42 = tpu.matmul %41, %39, %cst_22 {dimension_numbers = #tpu.dot_dimension_numbers<[1], [0], [0], [1], [0, 0, 1, 1], [], []>} : vector<4x4xf32>, vector<4x256xf32>, vector<4x256xf32> -> vector<4x256xf32>
    %43 = arith.addf %29, %42 : vector<4x256xf32>
    %c1_i32_23 = arith.constant 1 : i32
    %44 = tpu.dynamic_rotate %1 by %c1_i32_23 dim 1 : vector<4x256xf32>, i32 -> vector<4x256xf32>
    %c1_i32_24 = arith.constant 1 : i32
    %45 = vector.broadcast %c1_i32_24 : i32 to vector<1x256xi32>
    %46 = arith.cmpi sge, %3, %45 : vector<1x256xi32>
    %cst_25 = arith.constant 0.000000e+00 : f32
    %47 = vector.shape_cast %46 : vector<1x256xi1> to vector<1x256xi1>
    %48 = vector.broadcast %47 : vector<1x256xi1> to vector<4x256xi1>
    %49 = vector.broadcast %cst_25 : f32 to vector<4x256xf32>
    %50 = arith.select %48, %44, %49 : vector<4x256xi1>, vector<4x256xf32>
    %c3 = arith.constant 3 : index
    %c0_26 = arith.constant 0 : index
    %c0_27 = arith.constant 0 : index
    %51 = vector.load %arg2[%c3, %c0_26, %c0_27] : memref<9x4x4xf32, #tpu.memory_space<vmem>>, vector<1x4x4xf32>
    %52 = vector.shape_cast %51 : vector<1x4x4xf32> to vector<4x4xf32>
    %cst_28 = arith.constant dense<0.000000e+00> : vector<4x256xf32>
    %53 = tpu.matmul %52, %50, %cst_28 {dimension_numbers = #tpu.dot_dimension_numbers<[1], [0], [0], [1], [0, 0, 1, 1], [], []>} : vector<4x4xf32>, vector<4x256xf32>, vector<4x256xf32> -> vector<4x256xf32>
    %54 = arith.addf %43, %53 : vector<4x256xf32>
    %c4 = arith.constant 4 : index
    %c0_29 = arith.constant 0 : index
    %c0_30 = arith.constant 0 : index
    %55 = vector.load %arg2[%c4, %c0_29, %c0_30] : memref<9x4x4xf32, #tpu.memory_space<vmem>>, vector<1x4x4xf32>
    %56 = vector.shape_cast %55 : vector<1x4x4xf32> to vector<4x4xf32>
    %cst_31 = arith.constant dense<0.000000e+00> : vector<4x256xf32>
    %57 = tpu.matmul %56, %1, %cst_31 {dimension_numbers = #tpu.dot_dimension_numbers<[1], [0], [0], [1], [0, 0, 1, 1], [], []>} : vector<4x4xf32>, vector<4x256xf32>, vector<4x256xf32> -> vector<4x256xf32>
    %58 = arith.addf %54, %57 : vector<4x256xf32>
    %c255_i32 = arith.constant 255 : i32
    %59 = tpu.dynamic_rotate %1 by %c255_i32 dim 1 : vector<4x256xf32>, i32 -> vector<4x256xf32>
    %c15_i32_32 = arith.constant 15 : i32
    %60 = vector.broadcast %c15_i32_32 : i32 to vector<1x256xi32>
    %61 = arith.cmpi slt, %3, %60 : vector<1x256xi32>
    %cst_33 = arith.constant 0.000000e+00 : f32
    %62 = vector.shape_cast %61 : vector<1x256xi1> to vector<1x256xi1>
    %63 = vector.broadcast %62 : vector<1x256xi1> to vector<4x256xi1>
    %64 = vector.broadcast %cst_33 : f32 to vector<4x256xf32>
    %65 = arith.select %63, %59, %64 : vector<4x256xi1>, vector<4x256xf32>
    %c5 = arith.constant 5 : index
    %c0_34 = arith.constant 0 : index
    %c0_35 = arith.constant 0 : index
    %66 = vector.load %arg2[%c5, %c0_34, %c0_35] : memref<9x4x4xf32, #tpu.memory_space<vmem>>, vector<1x4x4xf32>
    %67 = vector.shape_cast %66 : vector<1x4x4xf32> to vector<4x4xf32>
    %cst_36 = arith.constant dense<0.000000e+00> : vector<4x256xf32>
    %68 = tpu.matmul %67, %65, %cst_36 {dimension_numbers = #tpu.dot_dimension_numbers<[1], [0], [0], [1], [0, 0, 1, 1], [], []>} : vector<4x4xf32>, vector<4x256xf32>, vector<4x256xf32> -> vector<4x256xf32>
    %69 = arith.addf %58, %68 : vector<4x256xf32>
    %c241_i32 = arith.constant 241 : i32
    %70 = tpu.dynamic_rotate %1 by %c241_i32 dim 1 : vector<4x256xf32>, i32 -> vector<4x256xf32>
    %c15_i32_37 = arith.constant 15 : i32
    %71 = vector.broadcast %c15_i32_37 : i32 to vector<1x256xi32>
    %72 = arith.cmpi slt, %2, %71 : vector<1x256xi32>
    %c1_i32_38 = arith.constant 1 : i32
    %73 = vector.broadcast %c1_i32_38 : i32 to vector<1x256xi32>
    %74 = arith.cmpi sge, %3, %73 : vector<1x256xi32>
    %75 = arith.andi %72, %74 : vector<1x256xi1>
    %cst_39 = arith.constant 0.000000e+00 : f32
    %76 = vector.shape_cast %75 : vector<1x256xi1> to vector<1x256xi1>
    %77 = vector.broadcast %76 : vector<1x256xi1> to vector<4x256xi1>
    %78 = vector.broadcast %cst_39 : f32 to vector<4x256xf32>
    %79 = arith.select %77, %70, %78 : vector<4x256xi1>, vector<4x256xf32>
    %c6 = arith.constant 6 : index
    %c0_40 = arith.constant 0 : index
    %c0_41 = arith.constant 0 : index
    %80 = vector.load %arg2[%c6, %c0_40, %c0_41] : memref<9x4x4xf32, #tpu.memory_space<vmem>>, vector<1x4x4xf32>
    %81 = vector.shape_cast %80 : vector<1x4x4xf32> to vector<4x4xf32>
    %cst_42 = arith.constant dense<0.000000e+00> : vector<4x256xf32>
    %82 = tpu.matmul %81, %79, %cst_42 {dimension_numbers = #tpu.dot_dimension_numbers<[1], [0], [0], [1], [0, 0, 1, 1], [], []>} : vector<4x4xf32>, vector<4x256xf32>, vector<4x256xf32> -> vector<4x256xf32>
    %83 = arith.addf %69, %82 : vector<4x256xf32>
    %c240_i32 = arith.constant 240 : i32
    %84 = tpu.dynamic_rotate %1 by %c240_i32 dim 1 : vector<4x256xf32>, i32 -> vector<4x256xf32>
    %c15_i32_43 = arith.constant 15 : i32
    %85 = vector.broadcast %c15_i32_43 : i32 to vector<1x256xi32>
    %86 = arith.cmpi slt, %2, %85 : vector<1x256xi32>
    %cst_44 = arith.constant 0.000000e+00 : f32
    %87 = vector.shape_cast %86 : vector<1x256xi1> to vector<1x256xi1>
    %88 = vector.broadcast %87 : vector<1x256xi1> to vector<4x256xi1>
    %89 = vector.broadcast %cst_44 : f32 to vector<4x256xf32>
    %90 = arith.select %88, %84, %89 : vector<4x256xi1>, vector<4x256xf32>
    %c7 = arith.constant 7 : index
    %c0_45 = arith.constant 0 : index
    %c0_46 = arith.constant 0 : index
    %91 = vector.load %arg2[%c7, %c0_45, %c0_46] : memref<9x4x4xf32, #tpu.memory_space<vmem>>, vector<1x4x4xf32>
    %92 = vector.shape_cast %91 : vector<1x4x4xf32> to vector<4x4xf32>
    %cst_47 = arith.constant dense<0.000000e+00> : vector<4x256xf32>
    %93 = tpu.matmul %92, %90, %cst_47 {dimension_numbers = #tpu.dot_dimension_numbers<[1], [0], [0], [1], [0, 0, 1, 1], [], []>} : vector<4x4xf32>, vector<4x256xf32>, vector<4x256xf32> -> vector<4x256xf32>
    %94 = arith.addf %83, %93 : vector<4x256xf32>
    %c239_i32 = arith.constant 239 : i32
    %95 = tpu.dynamic_rotate %1 by %c239_i32 dim 1 : vector<4x256xf32>, i32 -> vector<4x256xf32>
    %c15_i32_48 = arith.constant 15 : i32
    %96 = vector.broadcast %c15_i32_48 : i32 to vector<1x256xi32>
    %97 = arith.cmpi slt, %2, %96 : vector<1x256xi32>
    %c15_i32_49 = arith.constant 15 : i32
    %98 = vector.broadcast %c15_i32_49 : i32 to vector<1x256xi32>
    %99 = arith.cmpi slt, %3, %98 : vector<1x256xi32>
    %100 = arith.andi %97, %99 : vector<1x256xi1>
    %cst_50 = arith.constant 0.000000e+00 : f32
    %101 = vector.shape_cast %100 : vector<1x256xi1> to vector<1x256xi1>
    %102 = vector.broadcast %101 : vector<1x256xi1> to vector<4x256xi1>
    %103 = vector.broadcast %cst_50 : f32 to vector<4x256xf32>
    %104 = arith.select %102, %95, %103 : vector<4x256xi1>, vector<4x256xf32>
    %c8 = arith.constant 8 : index
    %c0_51 = arith.constant 0 : index
    %c0_52 = arith.constant 0 : index
    %105 = vector.load %arg2[%c8, %c0_51, %c0_52] : memref<9x4x4xf32, #tpu.memory_space<vmem>>, vector<1x4x4xf32>
    %106 = vector.shape_cast %105 : vector<1x4x4xf32> to vector<4x4xf32>
    %cst_53 = arith.constant dense<0.000000e+00> : vector<4x256xf32>
    %107 = tpu.matmul %106, %104, %cst_53 {dimension_numbers = #tpu.dot_dimension_numbers<[1], [0], [0], [1], [0, 0, 1, 1], [], []>} : vector<4x4xf32>, vector<4x256xf32>, vector<4x256xf32> -> vector<4x256xf32>
    %108 = arith.addf %94, %107 : vector<4x256xf32>
    %c0_54 = arith.constant 0 : index
    %c0_55 = arith.constant 0 : index
    %109 = vector.load %arg3[%c0_54, %c0_55] : memref<4x1xf32, #tpu.memory_space<vmem>>, vector<4x1xf32>
    %110 = vector.broadcast %109 : vector<4x1xf32> to vector<4x256xf32>
    %111 = arith.addf %1, %110 : vector<4x256xf32>
    %112 = arith.addf %111, %108 : vector<4x256xf32>
    %c0_56 = arith.constant 0 : index
    %c0_57 = arith.constant 0 : index
    %c0_58 = arith.constant 0 : index
    %113 = vector.load %arg6[%c0_56, %c0_57, %c0_58] : memref<1x4x256xf32, #tpu.memory_space<vmem>>, vector<1x4x256xf32>
    %114 = vector.shape_cast %113 : vector<1x4x256xf32> to vector<4x256xf32>
    %115 = vector.shape_cast %112 : vector<4x256xf32> to vector<1x4x256xf32>
    tpu.vector_store %arg6[%c0_56, %c0_57, %c0_58], %115 {strides = array<i32>} : memref<1x4x256xf32, #tpu.memory_space<vmem>>, vector<1x4x256xf32>,
    return
  }
  func.func @transform_0(%arg0: i32) -> (i32, i32, i32) {
    %c0_i32 = arith.constant 0 : i32
    %c0_i32_0 = arith.constant 0 : i32
    %c0_i32_1 = arith.constant 0 : i32
    return %arg0, %c0_i32, %c0_i32_0 : i32, i32, i32
  }
  func.func @transform_1(%arg0: i32) -> (i32, i32, i32) {
    %c0_i32 = arith.constant 0 : i32
    %c0_i32_0 = arith.constant 0 : i32
    %c0_i32_1 = arith.constant 0 : i32
    %c0_i32_2 = arith.constant 0 : i32
    return %c0_i32, %c0_i32_0, %c0_i32_1 : i32, i32, i32
  }
  func.func @transform_2(%arg0: i32) -> (i32, i32) {
    %c0_i32 = arith.constant 0 : i32
    %c0_i32_0 = arith.constant 0 : i32
    %c0_i32_1 = arith.constant 0 : i32
    return %c0_i32, %c0_i32_0 : i32, i32
  }
  func.func @transform_3(%arg0: i32) -> (i32, i32) {
    %c0_i32 = arith.constant 0 : i32
    %c0_i32_0 = arith.constant 0 : i32
    %c0_i32_1 = arith.constant 0 : i32
    return %c0_i32, %c0_i32_0 : i32, i32
  }
  func.func @transform_4(%arg0: i32) -> (i32, i32) {
    %c0_i32 = arith.constant 0 : i32
    %c0_i32_0 = arith.constant 0 : i32
    %c0_i32_1 = arith.constant 0 : i32
    return %c0_i32, %c0_i32_0 : i32, i32
  }
  func.func @transform_5(%arg0: i32) -> (i32, i32, i32) {
    %c0_i32 = arith.constant 0 : i32
    %c0_i32_0 = arith.constant 0 : i32
    %c0_i32_1 = arith.constant 0 : i32
    return %arg0, %c0_i32, %c0_i32_0 : i32, i32, i32
  }
}

</mosaic_0001>

<llo_original>
// kernel: tpu_custom_call.1
$region0: #{tpu_custom_call.1}
  #allocation0 [shape = 'u32[]', space=smem, size = 0x4, offset = 0x4, fixed_abs, tag = 'smem constant byte address 0x4 - core index']
  #allocation1 [shape = 'u32[144,128]{1,0:T(1,128)}', space=vmem, size = 0x12000, scoped, tag = 'internal scratch']
  %s0 = inlined_call_operand.vmem [shape: f32[2,4,256], index: 0, kind: input, shape index: {}]
  %s1 = inlined_call_operand.vmem [shape: f32[9,4,4], index: 1, kind: input, shape index: {}]
  %s2 = inlined_call_operand.vmem [shape: f32[4,1], index: 2, kind: input, shape index: {}]
  %s3 = inlined_call_operand.vmem [shape: s32[1,256], index: 3, kind: input, shape index: {}]
  %s4 = inlined_call_operand.vmem [shape: s32[1,256], index: 4, kind: input, shape index: {}]
  %s5 = inlined_call_operand.hbm [shape: f32[2,4,256], index: 5, kind: output, shape index: {}]
  %s6 = sld [smem:[#allocation0]]
  $region53: #{tpu_custom_call.1} parent=0
    _
  %s8 = ssub.s32 1, %s6
  %s9 = scalar_select 0, %s8, %s6
  $region1: #{tpu_custom_call.1} parent=0
    #allocation2 [shape = 'u8[8192]{0}', space=vmem, size = 0x2000, scoped, tag = 'output window, operand 0']
    #allocation3 [shape = 's32[2]{0}', space=sflag, size = 0x8, scoped, tag = 'scoped memory for tpu_custom_call.1']
    %10 = vsyncpa [#allocation3], 0
    %s11 = scalar_lea.sflag [#allocation3], 1
    %12 = vsyncpa %s11, 0
    loop: start=0, step=1, limit=4
    $region2: #{tpu_custom_call.1} parent=1 // loop_pre_header
      _
    $region3: #{tpu_custom_call.1} parent=1 // loop_header
      %s14 = sphi 0, %s18
      %p15 = scmp.ge.s32.totalorder %s14, 4
      %s24 = sphi 0, %s26
      %s27 = sphi 0, %s24
      %s28 = sphi 0, %s27
      %s44 = sphi 0, %s28
      %s48 = sphi 0, %s48
      %s50 = sphi 0, %s48
      %s51 = sphi 0, %s50
      %s65 = sphi 0, %s51
      %s69 = sphi 0, %s69
      %s71 = sphi 0, %s69
      %s72 = sphi 0, %s71
      %s86 = sphi 0, %s72
      %s90 = sphi 0, %s90
      %s92 = sphi 0, %s90
      %s93 = sphi 0, %s92
      %s107 = sphi 0, %s93
      %s111 = sphi 0, %s111
      %s113 = sphi 0, %s111
      %s114 = sphi 0, %s113
      %s128 = sphi 0, %s114
      %s134 = sphi 0, %s136
      %s137 = sphi 0, %s134
      %s138 = sphi 0, %s137
      %s154 = sphi 0, %s138
    $region4: #{tpu_custom_call.1} parent=1 // loop_header_branch
      %17 = sbr.rel (%p15) target = $region8
    $region5: #{tpu_custom_call.1} parent=1 // loop_body
      %s19 = ssub.s32 %s14, 1
      %s20 = ssub.s32 %s14, 2
      %s21 = sadd.s32 %s14, 1
      %s22 = ssub.s32 %s14, %s21
      %p23 = scmp.eq.s32.totalorder %s22, 0
      %s25 = sadd.s32 %s24, 1
      %s26 = scalar_select %p23, %s24, %s25
      %p29 = pneg %p23
      %p30 = scmp.eq.s32.totalorder %s14, 1
      %p31 = por %p29, %p30
      %p32 = scmp.ne.s32.totalorder %s24, %s27
      %p33 = scmp.eq.s32.totalorder %s14, 0
      %p34 = por %p32, %p33
      %p35 = scmp.ne.s32.totalorder %s24, %s27
      %p36 = scmp.eq.s32.totalorder %s19, 1
      %p37 = por %p35, %p36
      %p38 = scmp.ne.s32.totalorder %s27, %s28
      %p39 = scmp.eq.s32.totalorder %s19, 0
      %p40 = por %p38, %p39
      %p41 = scmp.ne.s32.totalorder %s27, %s28
      %p42 = scmp.eq.s32.totalorder %s20, 1
      %p43 = por %p41, %p42
      %p45 = scmp.ne.s32.totalorder %s28, %s44
      %p46 = scmp.eq.s32.totalorder %s20, 0
      %p47 = por %p45, %p46
      %s49 = sadd.s32 %s48, 1
      %p52 = scmp.eq.s32.totalorder %s14, 1
      %p53 = scmp.ne.s32.totalorder %s48, %s50
      %p54 = scmp.eq.s32.totalorder %s14, 0
      %p55 = por %p53, %p54
      %p56 = scmp.ne.s32.totalorder %s48, %s50
      %p57 = scmp.eq.s32.totalorder %s19, 1
      %p58 = por %p56, %p57
      %p59 = scmp.ne.s32.totalorder %s50, %s51
      %p60 = scmp.eq.s32.totalorder %s19, 0
      %p61 = por %p59, %p60
      %p62 = scmp.ne.s32.totalorder %s50, %s51
      %p63 = scmp.eq.s32.totalorder %s20, 1
      %p64 = por %p62, %p63
      %p66 = scmp.ne.s32.totalorder %s51, %s65
      %p67 = scmp.eq.s32.totalorder %s20, 0
      %p68 = por %p66, %p67
      %s70 = sadd.s32 %s69, 1
      %p73 = scmp.eq.s32.totalorder %s14, 1
      %p74 = scmp.ne.s32.totalorder %s69, %s71
      %p75 = scmp.eq.s32.totalorder %s14, 0
      %p76 = por %p74, %p75
      %p77 = scmp.ne.s32.totalorder %s69, %s71
      %p78 = scmp.eq.s32.totalorder %s19, 1
      %p79 = por %p77, %p78
      %p80 = scmp.ne.s32.totalorder %s71, %s72
      %p81 = scmp.eq.s32.totalorder %s19, 0
      %p82 = por %p80, %p81
      %p83 = scmp.ne.s32.totalorder %s71, %s72
      %p84 = scmp.eq.s32.totalorder %s20, 1
      %p85 = por %p83, %p84
      %p87 = scmp.ne.s32.totalorder %s72, %s86
      %p88 = scmp.eq.s32.totalorder %s20, 0
      %p89 = por %p87, %p88
      %s91 = sadd.s32 %s90, 1
      %p94 = scmp.eq.s32.totalorder %s14, 1
      %p95 = scmp.ne.s32.totalorder %s90, %s92
      %p96 = scmp.eq.s32.totalorder %s14, 0
      %p97 = por %p95, %p96
      %p98 = scmp.ne.s32.totalorder %s90, %s92
      %p99 = scmp.eq.s32.totalorder %s19, 1
      %p100 = por %p98, %p99
      %p101 = scmp.ne.s32.totalorder %s92, %s93
      %p102 = scmp.eq.s32.totalorder %s19, 0
      %p103 = por %p101, %p102
      %p104 = scmp.ne.s32.totalorder %s92, %s93
      %p105 = scmp.eq.s32.totalorder %s20, 1
      %p106 = por %p104, %p105
      %p108 = scmp.ne.s32.totalorder %s93, %s107
      %p109 = scmp.eq.s32.totalorder %s20, 0
      %p110 = por %p108, %p109
      %s112 = sadd.s32 %s111, 1
      %p115 = scmp.eq.s32.totalorder %s14, 1
      %p116 = scmp.ne.s32.totalorder %s111, %s113
      %p117 = scmp.eq.s32.totalorder %s14, 0
      %p118 = por %p116, %p117
      %p119 = scmp.ne.s32.totalorder %s111, %s113
      %p120 = scmp.eq.s32.totalorder %s19, 1
      %p121 = por %p119, %p120
      %p122 = scmp.ne.s32.totalorder %s113, %s114
      %p123 = scmp.eq.s32.totalorder %s19, 0
      %p124 = por %p122, %p123
      %p125 = scmp.ne.s32.totalorder %s113, %s114
      %p126 = scmp.eq.s32.totalorder %s20, 1
      %p127 = por %p125, %p126
      %p129 = scmp.ne.s32.totalorder %s114, %s128
      %p130 = scmp.eq.s32.totalorder %s20, 0
      %p131 = por %p129, %p130
      %s132 = ssub.s32 %s14, %s21
      %p133 = scmp.eq.s32.totalorder %s132, 0
      %s135 = sadd.s32 %s134, 1
      %s136 = scalar_select %p133, %s134, %s135
      %p139 = pneg %p133
      %p140 = scmp.eq.s32.totalorder %s14, 1
      %p141 = por %p139, %p140
      %p142 = scmp.ne.s32.totalorder %s134, %s137
      %p143 = scmp.eq.s32.totalorder %s14, 0
      %p144 = por %p142, %p143
      %p145 = scmp.ne.s32.totalorder %s134, %s137
      %p146 = scmp.eq.s32.totalorder %s19, 1
      %p147 = por %p145, %p146
      %p148 = scmp.ne.s32.totalorder %s137, %s138
      %p149 = scmp.eq.s32.totalorder %s19, 0
      %p150 = por %p148, %p149
      %p151 = scmp.ne.s32.totalorder %s137, %s138
      %p152 = scmp.eq.s32.totalorder %s20, 1
      %p153 = por %p151, %p152
      %p155 = scmp.ne.s32.totalorder %s138, %s154
      %p156 = scmp.eq.s32.totalorder %s20, 0
      %p157 = por %p155, %p156
      %p158 = scmp.le.s32.totalorder 1, %s14
      %p159 = scmp.lt.s32.totalorder %s14, 3
      %p160 = pnand %p158, %p159
      %p161 = pneg %p160
      // Predicated region
      $region9: #{tpu_custom_call.1} parent=5 // pred_check
        _
      $region10: #{tpu_custom_call.1} parent=5 // pred_check_branch
        %163 = sbr.rel (%p160) target = $region12
      $region11: #{tpu_custom_call.1} parent=5 // pred_region
        %s164 = ssub.s32 %s14, 1
        // Predicated region
        $region13: #{tpu_custom_call.1} parent=11 // pred_check
          %p165 = pneg %p61
        $region14: #{tpu_custom_call.1} parent=11 // pred_check_branch
          %167 = sbr.rel (%p165) target = $region16
        $region15: #{tpu_custom_call.1} parent=11 // pred_region
          _
        $region16: #{tpu_custom_call.1} parent=11 // pred_fallthru
          _
        // Predicated region
        $region17: #{tpu_custom_call.1} parent=11 // pred_check
          %p168 = pneg %p82
        $region18: #{tpu_custom_call.1} parent=11 // pred_check_branch
          %170 = sbr.rel (%p168) target = $region20
        $region19: #{tpu_custom_call.1} parent=11 // pred_region
          _
        $region20: #{tpu_custom_call.1} parent=11 // pred_fallthru
          _
        // Predicated region
        $region21: #{tpu_custom_call.1} parent=11 // pred_check
          %p171 = pneg %p103
        $region22: #{tpu_custom_call.1} parent=11 // pred_check_branch
          %173 = sbr.rel (%p171) target = $region24
        $region23: #{tpu_custom_call.1} parent=11 // pred_region
          _
        $region24: #{tpu_custom_call.1} parent=11 // pred_fallthru
          _
        // Predicated region
        $region25: #{tpu_custom_call.1} parent=11 // pred_check
          %p174 = pneg %p124
        $region26: #{tpu_custom_call.1} parent=11 // pred_check_branch
          %176 = sbr.rel (%p174) target = $region28
        $region27: #{tpu_custom_call.1} parent=11 // pred_region
          _
        $region28: #{tpu_custom_call.1} parent=11 // pred_fallthru
          _
      $region12: #{tpu_custom_call.1} parent=5 // pred_fallthru
        _
      %p177 = scmp.lt.s32.totalorder %s14, 2
      // Predicated region
      $region29: #{tpu_custom_call.1} parent=5 // pred_check
        %p178 = pneg %p177
      $region30: #{tpu_custom_call.1} parent=5 // pred_check_branch
        %180 = sbr.rel (%p178) target = $region32
      $region31: #{tpu_custom_call.1} parent=5 // pred_region
        // Predicated region
        $region33: #{tpu_custom_call.1} parent=31 // pred_check
          %p181 = pneg %p34
        $region34: #{tpu_custom_call.1} parent=31 // pred_check_branch
          %183 = sbr.rel (%p181) target = $region36
        $region35: #{tpu_custom_call.1} parent=31 // pred_region
          %p184 = scmp.lt.s32.totalorder %s14, 1
          %s185 = scalar_select %p184, %s14, 1
          %s186 = smul.addr %s185, 2
          %s187 = smul.addr %s186, 4
          %s188 = scalar_lea.vmem %s0, %s187
        $region36: #{tpu_custom_call.1} parent=31 // pred_fallthru
          _
      $region32: #{tpu_custom_call.1} parent=5 // pred_fallthru
        _
      %p189 = scmp.le.s32.totalorder 1, %s14
      %p190 = scmp.lt.s32.totalorder %s14, 3
      %p191 = pnand %p189, %p190
      %p192 = pneg %p191
      // Predicated region
      $region37: #{tpu_custom_call.1} parent=5 // pred_check
        _
      $region38: #{tpu_custom_call.1} parent=5 // pred_check_branch
        %194 = sbr.rel (%p191) target = $region40
      $region39: #{tpu_custom_call.1} parent=5 // pred_region
        %s195 = ssub.s32 %s14, 1
        %p196 = scmp.lt.s32.totalorder %s19, 1
        %s197 = scalar_select %p196, %s19, 1
        %s198 = smul.addr %s197, 2
        %s199 = smul.addr %s198, 4
        %s200 = scalar_lea.vmem %s0, %s199
        %p201 = pneg %p40
        %p202 = pneg %p37
        %p203 = pneg %p61
        %p204 = pneg %p58
        %p205 = pneg %p82
        %p206 = pneg %p79
        %p207 = pneg %p103
        %p208 = pneg %p100
        %p209 = pneg %p124
        %p210 = pneg %p121
        %p211 = pneg %p150
        %p212 = pneg %p147
        %s213 = sand.u32 %s137, 1
        %s214 = scalar_lea.sflag [#allocation3], %s213
        %s215 = sand.u32 %s137, 1
        %s216 = smul.addr %s215, 8
        %s217 = scalar_lea.vmem [#allocation2], %s216
        %p218 = scmp.lt.s32.totalorder %s19, 1
        %s219 = scalar_select %p218, %s19, 1
        %s220 = smul.addr %s219, 2
        %s221 = smul.addr %s220, 4
        %s222 = scalar_lea.vmem %s0, %s221
        %v223 = vld [vmem:[%s222] sm:$0xff]
        %v224 = vld [vmem:[%s3] sm:$0x3]
        %v225 = vld [vmem:[%s4] sm:$0x3]
        %v227 = vcombine.high %v223, %v223
        %229 = vrot.lane.b32.xlu0 %v223, 17
        %v230 = vpop.permute.xlu0 %229
        %231 = vrot.lane.b32.xlu0 %v227, 17
        %v232 = vpop.permute.xlu0 %231
        %v233 = vlaneseq
        %v234 = vand.u32 %v233, 127
        %vm235 = vcmp.lt.s32.totalorder %v234, 17
        %v236 = vsel %vm235, %v230, %v232
        %v237 = vsel %vm235, %v232, %v230
        %vm238 = vcmp.ge.s32.totalorder %v224, 1
        %vm239 = vcmp.ge.s32.totalorder %v225, 1
        %vm240 = vmand %vm238, %vm239
        %v241 = vsel %vm240, 1, 0
        %v242 = vlaneseq
        %v243 = vshrl.u32 %v242, 7
        %v244 = vsub.s32 0, %v243
        %v245 = vrot.slane %v241, %v244
        %v246 = vlaneseq
        %v247 = vshrl.u32 %v246, 7
        %v248 = vsub.s32 1, %v247
        %v249 = vrot.slane %v241, %v248
        %vm250 = vcmp.eq.s32.totalorder %v245, 1
        %vm251 = vcmp.eq.s32.totalorder %v249, 1
        %v252 = vsel %vm250, %v237, 0.0
        %v253 = vsel %vm251, %v236, 0.0
        %v254 = vld [vmem:[%s1] sm:$0xf]
        %255 = vrot.lane.b32.xlu0 %v223, 16
        %v256 = vpop.permute.xlu0 %255
        %257 = vrot.lane.b32.xlu0 %v227, 16
        %v258 = vpop.permute.xlu0 %257
        %vm259 = vcmp.lt.s32.totalorder %v234, 16
        %v260 = vsel %vm259, %v256, %v258
        %v261 = vsel %vm259, %v258, %v256
        %v262 = vsel %vm238, 1, 0
        %v263 = vlaneseq
        %v264 = vshrl.u32 %v263, 7
        %v265 = vsub.s32 0, %v264
        %v266 = vrot.slane %v262, %v265
        %v267 = vlaneseq
        %v268 = vshrl.u32 %v267, 7
        %v269 = vsub.s32 1, %v268
        %v270 = vrot.slane %v262, %v269
        %vm271 = vcmp.eq.s32.totalorder %v266, 1
        %vm272 = vcmp.eq.s32.totalorder %v270, 1
        %v273 = vsel %vm271, %v261, 0.0
        %v274 = vsel %vm272, %v260, 0.0
        %s275 = scalar_lea.vmem %s1, 4
        %v276 = vld [vmem:[%s275] sm:$0xf]
        %vm277 = vcmask 31744
        %v279 = vsel %vm277, %v276, 0
        %vm281 = vcmask 1043456
        %v283 = vsel %vm281, %v273, 0
        %v286 = vsel %vm281, %v274, 0
        %288 = vmatprep.subr.mxu0 0.0
        %289 = vmatpush1.msra.mxu0 0.0
        %290 = vmatprep.subr.mxu0 0.0
        %291 = vmatpush1.msra.mxu0 0.0
        %292 = vmatprep.subr.mxu0 0.0
        %293 = vmatpush1.msra.mxu0 0.0
        %294 = vmatprep.subr.mxu0 0.0
        %295 = vmatpush1.msra.mxu0 0.0
        %296 = vmatprep.subr.mxu0 0.0
        %297 = vmatpush1.msra.mxu0 0.0
        %298 = vmatprep.subr.mxu0 0.0
        %299 = vmatpush1.msra.mxu0 0.0
        %300 = vmatprep.subr.mxu0 0.0
        %301 = vmatpush1.msra.mxu0 0.0
        %302 = vmatprep.subr.mxu0 0.0
        %303 = vmatpush1.msra.mxu0 0.0
        %304 = vmatprep.subr.mxu0 0.0
        %305 = vmatpush1.msra.mxu0 0.0
        %306 = vmatprep.subr.mxu0 0.0
        %307 = vmatpush1.msra.mxu0 0.0
        %308 = vmatprep.subr.mxu0 0.0
        %309 = vmatpush1.msra.mxu0 0.0
        %310 = vmatprep.subr.mxu0 0.0
        %311 = vmatpush1.msra.mxu0 0.0
        %312 = vmatprep.subr.mxu0 0.0
        %313 = vmatpush1.msra.mxu0 0.0
        %314 = vmatprep.subr.mxu0 0.0
        %315 = vmatpush1.msra.mxu0 0.0
        %316 = vmatprep.subr.mxu0 0.0
        %317 = vmatpush1.msra.mxu0 0.0
        %318 = vmatprep.subr.mxu0 %v286
        %319 = vmatpush1.msra.mxu0 %v283
        %320 = vmatprep.subr.mxu0 0.0
        %321 = vmatpush2.msra.mxu0 0.0
        %322 = vmatprep.subr.mxu0 0.0
        %323 = vmatpush2.msra.mxu0 0.0
        %324 = vmatprep.subr.mxu0 0.0
        %325 = vmatpush2.msra.mxu0 0.0
        %326 = vmatprep.subr.mxu0 0.0
        %327 = vmatpush2.msra.mxu0 0.0
        %328 = vmatprep.subr.mxu0 0.0
        %329 = vmatpush2.msra.mxu0 0.0
        %330 = vmatprep.subr.mxu0 0.0
        %331 = vmatpush2.msra.mxu0 0.0
        %332 = vmatprep.subr.mxu0 0.0
        %333 = vmatpush2.msra.mxu0 0.0
        %334 = vmatprep.subr.mxu0 0.0
        %335 = vmatpush2.msra.mxu0 0.0
        %336 = vmatprep.subr.mxu0 0.0
        %337 = vmatpush2.msra.mxu0 0.0
        %338 = vmatprep.subr.mxu0 0.0
        %339 = vmatpush2.msra.mxu0 0.0
        %340 = vmatprep.subr.mxu0 0.0
        %341 = vmatpush2.msra.mxu0 0.0
        %342 = vmatprep.subr.mxu0 0.0
        %343 = vmatpush2.msra.mxu0 0.0
        %344 = vmatprep.subr.mxu0 0.0
        %345 = vmatpush2.msra.mxu0 0.0
        %346 = vmatprep.subr.mxu0 0.0
        %347 = vmatpush2.msra.mxu0 0.0
        %348 = vmatprep.subr.mxu0 0.0
        %349 = vmatpush2.msra.mxu0 0.0
        %350 = vmatprep.subr.mxu0 0.0
        %351 = vmatpush2.msra.mxu0 0.0
        %352 = vmatprep.mubr.f32.mxu0 0.0
        %353 = vmatmul.mubr.f32.gmra.mxu0 %v279
        %v354 = vpop.f32.mrf.mxu0
        %v355 = vadd.f32 0.0, %v354
        %v356 = vpop.f32.mrf.mxu0
        %v357 = vadd.f32 0.0, %v356
        %358 = vdwg.mxu0
        %v360 = vsel %vm277, %v254, 0
        %v363 = vsel %vm281, %v252, 0
        %v366 = vsel %vm281, %v253, 0
        %368 = vmatprep.subr.mxu0 0.0
        %369 = vmatpush1.msra.mxu0 0.0
        %370 = vmatprep.subr.mxu0 0.0
        %371 = vmatpush1.msra.mxu0 0.0
        %372 = vmatprep.subr.mxu0 0.0
        %373 = vmatpush1.msra.mxu0 0.0
        %374 = vmatprep.subr.mxu0 0.0
        %375 = vmatpush1.msra.mxu0 0.0
        %376 = vmatprep.subr.mxu0 0.0
        %377 = vmatpush1.msra.mxu0 0.0
        %378 = vmatprep.subr.mxu0 0.0
        %379 = vmatpush1.msra.mxu0 0.0
        %380 = vmatprep.subr.mxu0 0.0
        %381 = vmatpush1.msra.mxu0 0.0
        %382 = vmatprep.subr.mxu0 0.0
        %383 = vmatpush1.msra.mxu0 0.0
        %384 = vmatprep.subr.mxu0 0.0
        %385 = vmatpush1.msra.mxu0 0.0
        %386 = vmatprep.subr.mxu0 0.0
        %387 = vmatpush1.msra.mxu0 0.0
        %388 = vmatprep.subr.mxu0 0.0
        %389 = vmatpush1.msra.mxu0 0.0
        %390 = vmatprep.subr.mxu0 0.0
        %391 = vmatpush1.msra.mxu0 0.0
        %392 = vmatprep.subr.mxu0 0.0
        %393 = vmatpush1.msra.mxu0 0.0
        %394 = vmatprep.subr.mxu0 0.0
        %395 = vmatpush1.msra.mxu0 0.0
        %396 = vmatprep.subr.mxu0 0.0
        %397 = vmatpush1.msra.mxu0 0.0
        %398 = vmatprep.subr.mxu0 %v366
        %399 = vmatpush1.msra.mxu0 %v363
        %400 = vmatprep.subr.mxu0 0.0
        %401 = vmatpush2.msra.mxu0 0.0
        %402 = vmatprep.subr.mxu0 0.0
        %403 = vmatpush2.msra.mxu0 0.0
        %404 = vmatprep.subr.mxu0 0.0
        %405 = vmatpush2.msra.mxu0 0.0
        %406 = vmatprep.subr.mxu0 0.0
        %407 = vmatpush2.msra.mxu0 0.0
        %408 = vmatprep.subr.mxu0 0.0
        %409 = vmatpush2.msra.mxu0 0.0
        %410 = vmatprep.subr.mxu0 0.0
        %411 = vmatpush2.msra.mxu0 0.0
        %412 = vmatprep.subr.mxu0 0.0
        %413 = vmatpush2.msra.mxu0 0.0
        %414 = vmatprep.subr.mxu0 0.0
        %415 = vmatpush2.msra.mxu0 0.0
        %416 = vmatprep.subr.mxu0 0.0
        %417 = vmatpush2.msra.mxu0 0.0
        %418 = vmatprep.subr.mxu0 0.0
        %419 = vmatpush2.msra.mxu0 0.0
        %420 = vmatprep.subr.mxu0 0.0
        %421 = vmatpush2.msra.mxu0 0.0
        %422 = vmatprep.subr.mxu0 0.0
        %423 = vmatpush2.msra.mxu0 0.0
        %424 = vmatprep.subr.mxu0 0.0
        %425 = vmatpush2.msra.mxu0 0.0
        %426 = vmatprep.subr.mxu0 0.0
        %427 = vmatpush2.msra.mxu0 0.0
        %428 = vmatprep.subr.mxu0 0.0
        %429 = vmatpush2.msra.mxu0 0.0
        %430 = vmatprep.subr.mxu0 0.0
        %431 = vmatpush2.msra.mxu0 0.0
        %432 = vmatprep.mubr.f32.mxu0 0.0
        %433 = vmatmul.mubr.f32.gmra.mxu0 %v360
        %v434 = vpop.f32.mrf.mxu0
        %v435 = vadd.f32 %v355, %v434
        %v436 = vpop.f32.mrf.mxu0
        %v437 = vadd.f32 %v357, %v436
        %438 = vdwg.mxu0
        %439 = vrot.lane.b32.xlu0 %v223, 15
        %v440 = vpop.permute.xlu0 %439
        %441 = vrot.lane.b32.xlu0 %v227, 15
        %v442 = vpop.permute.xlu0 %441
        %vm443 = vcmp.lt.s32.totalorder %v234, 15
        %v444 = vsel %vm443, %v440, %v442
        %v445 = vsel %vm443, %v442, %v440
        %vm446 = vcmp.lt.s32.totalorder %v225, 15
        %vm447 = vmand %vm238, %vm446
        %v448 = vsel %vm447, 1, 0
        %v449 = vlaneseq
        %v450 = vshrl.u32 %v449, 7
        %v451 = vsub.s32 0, %v450
        %v452 = vrot.slane %v448, %v451
        %v453 = vlaneseq
        %v454 = vshrl.u32 %v453, 7
        %v455 = vsub.s32 1, %v454
        %v456 = vrot.slane %v448, %v455
        %vm457 = vcmp.eq.s32.totalorder %v452, 1
        %vm458 = vcmp.eq.s32.totalorder %v456, 1
        %v459 = vsel %vm457, %v445, 0.0
        %v460 = vsel %vm458, %v444, 0.0
        %s461 = scalar_lea.vmem %s1, 8
        %v462 = vld [vmem:[%s461] sm:$0xf]
        %v464 = vsel %vm277, %v462, 0
        %v467 = vsel %vm281, %v459, 0
        %v470 = vsel %vm281, %v460, 0
        %472 = vmatprep.subr.mxu0 0.0
        %473 = vmatpush1.msra.mxu0 0.0
        %474 = vmatprep.subr.mxu0 0.0
        %475 = vmatpush1.msra.mxu0 0.0
        %476 = vmatprep.subr.mxu0 0.0
        %477 = vmatpush1.msra.mxu0 0.0
        %478 = vmatprep.subr.mxu0 0.0
        %479 = vmatpush1.msra.mxu0 0.0
        %480 = vmatprep.subr.mxu0 0.0
        %481 = vmatpush1.msra.mxu0 0.0
        %482 = vmatprep.subr.mxu0 0.0
        %483 = vmatpush1.msra.mxu0 0.0
        %484 = vmatprep.subr.mxu0 0.0
        %485 = vmatpush1.msra.mxu0 0.0
        %486 = vmatprep.subr.mxu0 0.0
        %487 = vmatpush1.msra.mxu0 0.0
        %488 = vmatprep.subr.mxu0 0.0
        %489 = vmatpush1.msra.mxu0 0.0
        %490 = vmatprep.subr.mxu0 0.0
        %491 = vmatpush1.msra.mxu0 0.0
        %492 = vmatprep.subr.mxu0 0.0
        %493 = vmatpush1.msra.mxu0 0.0
        %494 = vmatprep.subr.mxu0 0.0
        %495 = vmatpush1.msra.mxu0 0.0
        %496 = vmatprep.subr.mxu0 0.0
        %497 = vmatpush1.msra.mxu0 0.0
        %498 = vmatprep.subr.mxu0 0.0
        %499 = vmatpush1.msra.mxu0 0.0
        %500 = vmatprep.subr.mxu0 0.0
        %501 = vmatpush1.msra.mxu0 0.0
        %502 = vmatprep.subr.mxu0 %v470
        %503 = vmatpush1.msra.mxu0 %v467
        %504 = vmatprep.subr.mxu0 0.0
        %505 = vmatpush2.msra.mxu0 0.0
        %506 = vmatprep.subr.mxu0 0.0
        %507 = vmatpush2.msra.mxu0 0.0
        %508 = vmatprep.subr.mxu0 0.0
        %509 = vmatpush2.msra.mxu0 0.0
        %510 = vmatprep.subr.mxu0 0.0
        %511 = vmatpush2.msra.mxu0 0.0
        %512 = vmatprep.subr.mxu0 0.0
        %513 = vmatpush2.msra.mxu0 0.0
        %514 = vmatprep.subr.mxu0 0.0
        %515 = vmatpush2.msra.mxu0 0.0
        %516 = vmatprep.subr.mxu0 0.0
        %517 = vmatpush2.msra.mxu0 0.0
        %518 = vmatprep.subr.mxu0 0.0
        %519 = vmatpush2.msra.mxu0 0.0
        %520 = vmatprep.subr.mxu0 0.0
        %521 = vmatpush2.msra.mxu0 0.0
        %522 = vmatprep.subr.mxu0 0.0
        %523 = vmatpush2.msra.mxu0 0.0
        %524 = vmatprep.subr.mxu0 0.0
        %525 = vmatpush2.msra.mxu0 0.0
        %526 = vmatprep.subr.mxu0 0.0
        %527 = vmatpush2.msra.mxu0 0.0
        %528 = vmatprep.subr.mxu0 0.0
        %529 = vmatpush2.msra.mxu0 0.0
        %530 = vmatprep.subr.mxu0 0.0
        %531 = vmatpush2.msra.mxu0 0.0
        %532 = vmatprep.subr.mxu0 0.0
        %533 = vmatpush2.msra.mxu0 0.0
        %534 = vmatprep.subr.mxu0 0.0
        %535 = vmatpush2.msra.mxu0 0.0
        %536 = vmatprep.mubr.f32.mxu0 0.0
        %537 = vmatmul.mubr.f32.gmra.mxu0 %v464
        %v538 = vpop.f32.mrf.mxu0
        %v539 = vadd.f32 0.0, %v538
        %v540 = vpop.f32.mrf.mxu0
        %v541 = vadd.f32 0.0, %v540
        %542 = vdwg.mxu0
        %v543 = vadd.f32 %v435, %v539
        %v544 = vadd.f32 %v437, %v541
        %545 = vrot.lane.b32.xlu0 %v223, 1
        %v546 = vpop.permute.xlu0 %545
        %547 = vrot.lane.b32.xlu0 %v227, 1
        %v548 = vpop.permute.xlu0 %547
        %vm549 = vcmp.lt.s32.totalorder %v234, 1
        %v550 = vsel %vm549, %v546, %v548
        %v551 = vsel %vm549, %v548, %v546
        %v552 = vsel %vm239, 1, 0
        %v553 = vlaneseq
        %v554 = vshrl.u32 %v553, 7
        %v555 = vsub.s32 0, %v554
        %v556 = vrot.slane %v552, %v555
        %v557 = vlaneseq
        %v558 = vshrl.u32 %v557, 7
        %v559 = vsub.s32 1, %v558
        %v560 = vrot.slane %v552, %v559
        %vm561 = vcmp.eq.s32.totalorder %v556, 1
        %vm562 = vcmp.eq.s32.totalorder %v560, 1
        %v563 = vsel %vm561, %v551, 0.0
        %v564 = vsel %vm562, %v550, 0.0
        %s565 = scalar_lea.vmem %s1, 12
        %v566 = vld [vmem:[%s565] sm:$0xf]
        %v568 = vsel %vm277, %v566, 0
        %v571 = vsel %vm281, %v563, 0
        %v574 = vsel %vm281, %v564, 0
        %576 = vmatprep.subr.mxu0 0.0
        %577 = vmatpush1.msra.mxu0 0.0
        %578 = vmatprep.subr.mxu0 0.0
        %579 = vmatpush1.msra.mxu0 0.0
        %580 = vmatprep.subr.mxu0 0.0
        %581 = vmatpush1.msra.mxu0 0.0
        %582 = vmatprep.subr.mxu0 0.0
        %583 = vmatpush1.msra.mxu0 0.0
        %584 = vmatprep.subr.mxu0 0.0
        %585 = vmatpush1.msra.mxu0 0.0
        %586 = vmatprep.subr.mxu0 0.0
        %587 = vmatpush1.msra.mxu0 0.0
        %588 = vmatprep.subr.mxu0 0.0
        %589 = vmatpush1.msra.mxu0 0.0
        %590 = vmatprep.subr.mxu0 0.0
        %591 = vmatpush1.msra.mxu0 0.0
        %592 = vmatprep.subr.mxu0 0.0
        %593 = vmatpush1.msra.mxu0 0.0
        %594 = vmatprep.subr.mxu0 0.0
        %595 = vmatpush1.msra.mxu0 0.0
        %596 = vmatprep.subr.mxu0 0.0
        %597 = vmatpush1.msra.mxu0 0.0
        %598 = vmatprep.subr.mxu0 0.0
        %599 = vmatpush1.msra.mxu0 0.0
        %600 = vmatprep.subr.mxu0 0.0
        %601 = vmatpush1.msra.mxu0 0.0
        %602 = vmatprep.subr.mxu0 0.0
        %603 = vmatpush1.msra.mxu0 0.0
        %604 = vmatprep.subr.mxu0 0.0
        %605 = vmatpush1.msra.mxu0 0.0
        %606 = vmatprep.subr.mxu0 %v574
        %607 = vmatpush1.msra.mxu0 %v571
        %608 = vmatprep.subr.mxu0 0.0
        %609 = vmatpush2.msra.mxu0 0.0
        %610 = vmatprep.subr.mxu0 0.0
        %611 = vmatpush2.msra.mxu0 0.0
        %612 = vmatprep.subr.mxu0 0.0
        %613 = vmatpush2.msra.mxu0 0.0
        %614 = vmatprep.subr.mxu0 0.0
        %615 = vmatpush2.msra.mxu0 0.0
        %616 = vmatprep.subr.mxu0 0.0
        %617 = vmatpush2.msra.mxu0 0.0
        %618 = vmatprep.subr.mxu0 0.0
        %619 = vmatpush2.msra.mxu0 0.0
        %620 = vmatprep.subr.mxu0 0.0
        %621 = vmatpush2.msra.mxu0 0.0
        %622 = vmatprep.subr.mxu0 0.0
        %623 = vmatpush2.msra.mxu0 0.0
        %624 = vmatprep.subr.mxu0 0.0
        %625 = vmatpush2.msra.mxu0 0.0
        %626 = vmatprep.subr.mxu0 0.0
        %627 = vmatpush2.msra.mxu0 0.0
        %628 = vmatprep.subr.mxu0 0.0
        %629 = vmatpush2.msra.mxu0 0.0
        %630 = vmatprep.subr.mxu0 0.0
        %631 = vmatpush2.msra.mxu0 0.0
        %632 = vmatprep.subr.mxu0 0.0
        %633 = vmatpush2.msra.mxu0 0.0
        %634 = vmatprep.subr.mxu0 0.0
        %635 = vmatpush2.msra.mxu0 0.0
        %636 = vmatprep.subr.mxu0 0.0
        %637 = vmatpush2.msra.mxu0 0.0
        %638 = vmatprep.subr.mxu0 0.0
        %639 = vmatpush2.msra.mxu0 0.0
        %640 = vmatprep.mubr.f32.mxu0 0.0
        %641 = vmatmul.mubr.f32.gmra.mxu0 %v568
        %v642 = vpop.f32.mrf.mxu0
        %v643 = vadd.f32 0.0, %v642
        %v644 = vpop.f32.mrf.mxu0
        %v645 = vadd.f32 0.0, %v644
        %646 = vdwg.mxu0
        %v647 = vadd.f32 %v543, %v643
        %v648 = vadd.f32 %v544, %v645
        %s649 = scalar_lea.vmem %s1, 16
        %v650 = vld [vmem:[%s649] sm:$0xf]
        %v652 = vsel %vm277, %v650, 0
        %v654 = vsel %vm281, %v223, 0
        %v656 = vsel %vm281, %v227, 0
        %658 = vmatprep.subr.mxu0 0.0
        %659 = vmatpush1.msra.mxu0 0.0
        %660 = vmatprep.subr.mxu0 0.0
        %661 = vmatpush1.msra.mxu0 0.0
        %662 = vmatprep.subr.mxu0 0.0
        %663 = vmatpush1.msra.mxu0 0.0
        %664 = vmatprep.subr.mxu0 0.0
        %665 = vmatpush1.msra.mxu0 0.0
        %666 = vmatprep.subr.mxu0 0.0
        %667 = vmatpush1.msra.mxu0 0.0
        %668 = vmatprep.subr.mxu0 0.0
        %669 = vmatpush1.msra.mxu0 0.0
        %670 = vmatprep.subr.mxu0 0.0
        %671 = vmatpush1.msra.mxu0 0.0
        %672 = vmatprep.subr.mxu0 0.0
        %673 = vmatpush1.msra.mxu0 0.0
        %674 = vmatprep.subr.mxu0 0.0
        %675 = vmatpush1.msra.mxu0 0.0
        %676 = vmatprep.subr.mxu0 0.0
        %677 = vmatpush1.msra.mxu0 0.0
        %678 = vmatprep.subr.mxu0 0.0
        %679 = vmatpush1.msra.mxu0 0.0
        %680 = vmatprep.subr.mxu0 0.0
        %681 = vmatpush1.msra.mxu0 0.0
        %682 = vmatprep.subr.mxu0 0.0
        %683 = vmatpush1.msra.mxu0 0.0
        %684 = vmatprep.subr.mxu0 0.0
        %685 = vmatpush1.msra.mxu0 0.0
        %686 = vmatprep.subr.mxu0 0.0
        %687 = vmatpush1.msra.mxu0 0.0
        %688 = vmatprep.subr.mxu0 %v656
        %689 = vmatpush1.msra.mxu0 %v654
        %690 = vmatprep.subr.mxu0 0.0
        %691 = vmatpush2.msra.mxu0 0.0
        %692 = vmatprep.subr.mxu0 0.0
        %693 = vmatpush2.msra.mxu0 0.0
        %694 = vmatprep.subr.mxu0 0.0
        %695 = vmatpush2.msra.mxu0 0.0
        %696 = vmatprep.subr.mxu0 0.0
        %697 = vmatpush2.msra.mxu0 0.0
        %698 = vmatprep.subr.mxu0 0.0
        %699 = vmatpush2.msra.mxu0 0.0
        %700 = vmatprep.subr.mxu0 0.0
        %701 = vmatpush2.msra.mxu0 0.0
        %702 = vmatprep.subr.mxu0 0.0
        %703 = vmatpush2.msra.mxu0 0.0
        %704 = vmatprep.subr.mxu0 0.0
        %705 = vmatpush2.msra.mxu0 0.0
        %706 = vmatprep.subr.mxu0 0.0
        %707 = vmatpush2.msra.mxu0 0.0
        %708 = vmatprep.subr.mxu0 0.0
        %709 = vmatpush2.msra.mxu0 0.0
        %710 = vmatprep.subr.mxu0 0.0
        %711 = vmatpush2.msra.mxu0 0.0
        %712 = vmatprep.subr.mxu0 0.0
        %713 = vmatpush2.msra.mxu0 0.0
        %714 = vmatprep.subr.mxu0 0.0
        %715 = vmatpush2.msra.mxu0 0.0
        %716 = vmatprep.subr.mxu0 0.0
        %717 = vmatpush2.msra.mxu0 0.0
        %718 = vmatprep.subr.mxu0 0.0
        %719 = vmatpush2.msra.mxu0 0.0
        %720 = vmatprep.subr.mxu0 0.0
        %721 = vmatpush2.msra.mxu0 0.0
        %722 = vmatprep.mubr.f32.mxu0 0.0
        %723 = vmatmul.mubr.f32.gmra.mxu0 %v652
        %v724 = vpop.f32.mrf.mxu0
        %v725 = vadd.f32 0.0, %v724
        %v726 = vpop.f32.mrf.mxu0
        %v727 = vadd.f32 0.0, %v726
        %728 = vdwg.mxu0
        %v729 = vadd.f32 %v647, %v725
        %v730 = vadd.f32 %v648, %v727
        %731 = vrot.lane.b32.xlu0 %v223, 127
        %v732 = vpop.permute.xlu0 %731
        %733 = vrot.lane.b32.xlu0 %v227, 127
        %v734 = vpop.permute.xlu0 %733
        %vm735 = vcmp.lt.s32.totalorder %v234, 127
        %v736 = vsel %vm735, %v732, %v734
        %v737 = vsel %vm735, %v734, %v732
        %v738 = vsel %vm446, 1, 0
        %v739 = vlaneseq
        %v740 = vshrl.u32 %v739, 7
        %v741 = vsub.s32 0, %v740
        %v742 = vrot.slane %v738, %v741
        %v743 = vlaneseq
        %v744 = vshrl.u32 %v743, 7
        %v745 = vsub.s32 1, %v744
        %v746 = vrot.slane %v738, %v745
        %vm747 = vcmp.eq.s32.totalorder %v742, 1
        %vm748 = vcmp.eq.s32.totalorder %v746, 1
        %v749 = vsel %vm747, %v736, 0.0
        %v750 = vsel %vm748, %v737, 0.0
        %s751 = scalar_lea.vmem %s1, 20
        %v752 = vld [vmem:[%s751] sm:$0xf]
        %v754 = vsel %vm277, %v752, 0
        %v757 = vsel %vm281, %v749, 0
        %v760 = vsel %vm281, %v750, 0
        %762 = vmatprep.subr.mxu0 0.0
        %763 = vmatpush1.msra.mxu0 0.0
        %764 = vmatprep.subr.mxu0 0.0
        %765 = vmatpush1.msra.mxu0 0.0
        %766 = vmatprep.subr.mxu0 0.0
        %767 = vmatpush1.msra.mxu0 0.0
        %768 = vmatprep.subr.mxu0 0.0
        %769 = vmatpush1.msra.mxu0 0.0
        %770 = vmatprep.subr.mxu0 0.0
        %771 = vmatpush1.msra.mxu0 0.0
        %772 = vmatprep.subr.mxu0 0.0
        %773 = vmatpush1.msra.mxu0 0.0
        %774 = vmatprep.subr.mxu0 0.0
        %775 = vmatpush1.msra.mxu0 0.0
        %776 = vmatprep.subr.mxu0 0.0
        %777 = vmatpush1.msra.mxu0 0.0
        %778 = vmatprep.subr.mxu0 0.0
        %779 = vmatpush1.msra.mxu0 0.0
        %780 = vmatprep.subr.mxu0 0.0
        %781 = vmatpush1.msra.mxu0 0.0
        %782 = vmatprep.subr.mxu0 0.0
        %783 = vmatpush1.msra.mxu0 0.0
        %784 = vmatprep.subr.mxu0 0.0
        %785 = vmatpush1.msra.mxu0 0.0
        %786 = vmatprep.subr.mxu0 0.0
        %787 = vmatpush1.msra.mxu0 0.0
        %788 = vmatprep.subr.mxu0 0.0
        %789 = vmatpush1.msra.mxu0 0.0
        %790 = vmatprep.subr.mxu0 0.0
        %791 = vmatpush1.msra.mxu0 0.0
        %792 = vmatprep.subr.mxu0 %v760
        %793 = vmatpush1.msra.mxu0 %v757
        %794 = vmatprep.subr.mxu0 0.0
        %795 = vmatpush2.msra.mxu0 0.0
        %796 = vmatprep.subr.mxu0 0.0
        %797 = vmatpush2.msra.mxu0 0.0
        %798 = vmatprep.subr.mxu0 0.0
        %799 = vmatpush2.msra.mxu0 0.0
        %800 = vmatprep.subr.mxu0 0.0
        %801 = vmatpush2.msra.mxu0 0.0
        %802 = vmatprep.subr.mxu0 0.0
        %803 = vmatpush2.msra.mxu0 0.0
        %804 = vmatprep.subr.mxu0 0.0
        %805 = vmatpush2.msra.mxu0 0.0
        %806 = vmatprep.subr.mxu0 0.0
        %807 = vmatpush2.msra.mxu0 0.0
        %808 = vmatprep.subr.mxu0 0.0
        %809 = vmatpush2.msra.mxu0 0.0
        %810 = vmatprep.subr.mxu0 0.0
        %811 = vmatpush2.msra.mxu0 0.0
        %812 = vmatprep.subr.mxu0 0.0
        %813 = vmatpush2.msra.mxu0 0.0
        %814 = vmatprep.subr.mxu0 0.0
        %815 = vmatpush2.msra.mxu0 0.0
        %816 = vmatprep.subr.mxu0 0.0
        %817 = vmatpush2.msra.mxu0 0.0
        %818 = vmatprep.subr.mxu0 0.0
        %819 = vmatpush2.msra.mxu0 0.0
        %820 = vmatprep.subr.mxu0 0.0
        %821 = vmatpush2.msra.mxu0 0.0
        %822 = vmatprep.subr.mxu0 0.0
        %823 = vmatpush2.msra.mxu0 0.0
        %824 = vmatprep.subr.mxu0 0.0
        %825 = vmatpush2.msra.mxu0 0.0
        %826 = vmatprep.mubr.f32.mxu0 0.0
        %827 = vmatmul.mubr.f32.gmra.mxu0 %v754
        %v828 = vpop.f32.mrf.mxu0
        %v829 = vadd.f32 0.0, %v828
        %v830 = vpop.f32.mrf.mxu0
        %v831 = vadd.f32 0.0, %v830
        %832 = vdwg.mxu0
        %v833 = vadd.f32 %v729, %v829
        %v834 = vadd.f32 %v730, %v831
        %835 = vrot.lane.b32.xlu0 %v223, 113
        %v836 = vpop.permute.xlu0 %835
        %837 = vrot.lane.b32.xlu0 %v227, 113
        %v838 = vpop.permute.xlu0 %837
        %vm839 = vcmp.lt.s32.totalorder %v234, 113
        %v840 = vsel %vm839, %v836, %v838
        %v841 = vsel %vm839, %v838, %v836
        %vm842 = vcmp.lt.s32.totalorder %v224, 15
        %vm843 = vmand %vm842, %vm239
        %v844 = vsel %vm843, 1, 0
        %v845 = vlaneseq
        %v846 = vshrl.u32 %v845, 7
        %v847 = vsub.s32 0, %v846
        %v848 = vrot.slane %v844, %v847
        %v849 = vlaneseq
        %v850 = vshrl.u32 %v849, 7
        %v851 = vsub.s32 1, %v850
        %v852 = vrot.slane %v844, %v851
        %vm853 = vcmp.eq.s32.totalorder %v848, 1
        %vm854 = vcmp.eq.s32.totalorder %v852, 1
        %v855 = vsel %vm853, %v840, 0.0
        %v856 = vsel %vm854, %v841, 0.0
        %s857 = scalar_lea.vmem %s1, 24
        %v858 = vld [vmem:[%s857] sm:$0xf]
        %v860 = vsel %vm277, %v858, 0
        %v863 = vsel %vm281, %v855, 0
        %v866 = vsel %vm281, %v856, 0
        %868 = vmatprep.subr.mxu0 0.0
        %869 = vmatpush1.msra.mxu0 0.0
        %870 = vmatprep.subr.mxu0 0.0
        %871 = vmatpush1.msra.mxu0 0.0
        %872 = vmatprep.subr.mxu0 0.0
        %873 = vmatpush1.msra.mxu0 0.0
        %874 = vmatprep.subr.mxu0 0.0
        %875 = vmatpush1.msra.mxu0 0.0
        %876 = vmatprep.subr.mxu0 0.0
        %877 = vmatpush1.msra.mxu0 0.0
        %878 = vmatprep.subr.mxu0 0.0
        %879 = vmatpush1.msra.mxu0 0.0
        %880 = vmatprep.subr.mxu0 0.0
        %881 = vmatpush1.msra.mxu0 0.0
        %882 = vmatprep.subr.mxu0 0.0
        %883 = vmatpush1.msra.mxu0 0.0
        %884 = vmatprep.subr.mxu0 0.0
        %885 = vmatpush1.msra.mxu0 0.0
        %886 = vmatprep.subr.mxu0 0.0
        %887 = vmatpush1.msra.mxu0 0.0
        %888 = vmatprep.subr.mxu0 0.0
        %889 = vmatpush1.msra.mxu0 0.0
        %890 = vmatprep.subr.mxu0 0.0
        %891 = vmatpush1.msra.mxu0 0.0
        %892 = vmatprep.subr.mxu0 0.0
        %893 = vmatpush1.msra.mxu0 0.0
        %894 = vmatprep.subr.mxu0 0.0
        %895 = vmatpush1.msra.mxu0 0.0
        %896 = vmatprep.subr.mxu0 0.0
        %897 = vmatpush1.msra.mxu0 0.0
        %898 = vmatprep.subr.mxu0 %v866
        %899 = vmatpush1.msra.mxu0 %v863
        %900 = vmatprep.subr.mxu0 0.0
        %901 = vmatpush2.msra.mxu0 0.0
        %902 = vmatprep.subr.mxu0 0.0
        %903 = vmatpush2.msra.mxu0 0.0
        %904 = vmatprep.subr.mxu0 0.0
        %905 = vmatpush2.msra.mxu0 0.0
        %906 = vmatprep.subr.mxu0 0.0
        %907 = vmatpush2.msra.mxu0 0.0
        %908 = vmatprep.subr.mxu0 0.0
        %909 = vmatpush2.msra.mxu0 0.0
        %910 = vmatprep.subr.mxu0 0.0
        %911 = vmatpush2.msra.mxu0 0.0
        %912 = vmatprep.subr.mxu0 0.0
        %913 = vmatpush2.msra.mxu0 0.0
        %914 = vmatprep.subr.mxu0 0.0
        %915 = vmatpush2.msra.mxu0 0.0
        %916 = vmatprep.subr.mxu0 0.0
        %917 = vmatpush2.msra.mxu0 0.0
        %918 = vmatprep.subr.mxu0 0.0
        %919 = vmatpush2.msra.mxu0 0.0
        %920 = vmatprep.subr.mxu0 0.0
        %921 = vmatpush2.msra.mxu0 0.0
        %922 = vmatprep.subr.mxu0 0.0
        %923 = vmatpush2.msra.mxu0 0.0
        %924 = vmatprep.subr.mxu0 0.0
        %925 = vmatpush2.msra.mxu0 0.0
        %926 = vmatprep.subr.mxu0 0.0
        %927 = vmatpush2.msra.mxu0 0.0
        %928 = vmatprep.subr.mxu0 0.0
        %929 = vmatpush2.msra.mxu0 0.0
        %930 = vmatprep.subr.mxu0 0.0
        %931 = vmatpush2.msra.mxu0 0.0
        %932 = vmatprep.mubr.f32.mxu0 0.0
        %933 = vmatmul.mubr.f32.gmra.mxu0 %v860
        %v934 = vpop.f32.mrf.mxu0
        %v935 = vadd.f32 0.0, %v934
        %v936 = vpop.f32.mrf.mxu0
        %v937 = vadd.f32 0.0, %v936
        %938 = vdwg.mxu0
        %v939 = vadd.f32 %v833, %v935
        %v940 = vadd.f32 %v834, %v937
        %941 = vrot.lane.b32.xlu0 %v223, 112
        %v942 = vpop.permute.xlu0 %941
        %943 = vrot.lane.b32.xlu0 %v227, 112
        %v944 = vpop.permute.xlu0 %943
        %vm945 = vcmp.lt.s32.totalorder %v234, 112
        %v946 = vsel %vm945, %v942, %v944
        %v947 = vsel %vm945, %v944, %v942
        %v948 = vsel %vm842, 1, 0
        %v949 = vlaneseq
        %v950 = vshrl.u32 %v949, 7
        %v951 = vsub.s32 0, %v950
        %v952 = vrot.slane %v948, %v951
        %v953 = vlaneseq
        %v954 = vshrl.u32 %v953, 7
        %v955 = vsub.s32 1, %v954
        %v956 = vrot.slane %v948, %v955
        %vm957 = vcmp.eq.s32.totalorder %v952, 1
        %vm958 = vcmp.eq.s32.totalorder %v956, 1
        %v959 = vsel %vm957, %v946, 0.0
        %v960 = vsel %vm958, %v947, 0.0
        %s961 = scalar_lea.vmem %s1, 28
        %v962 = vld [vmem:[%s961] sm:$0xf]
        %v964 = vsel %vm277, %v962, 0
        %v967 = vsel %vm281, %v959, 0
        %v970 = vsel %vm281, %v960, 0
        %972 = vmatprep.subr.mxu0 0.0
        %973 = vmatpush1.msra.mxu0 0.0
        %974 = vmatprep.subr.mxu0 0.0
        %975 = vmatpush1.msra.mxu0 0.0
        %976 = vmatprep.subr.mxu0 0.0
        %977 = vmatpush1.msra.mxu0 0.0
        %978 = vmatprep.subr.mxu0 0.0
        %979 = vmatpush1.msra.mxu0 0.0
        %980 = vmatprep.subr.mxu0 0.0
        %981 = vmatpush1.msra.mxu0 0.0
        %982 = vmatprep.subr.mxu0 0.0
        %983 = vmatpush1.msra.mxu0 0.0
        %984 = vmatprep.subr.mxu0 0.0
        %985 = vmatpush1.msra.mxu0 0.0
        %986 = vmatprep.subr.mxu0 0.0
        %987 = vmatpush1.msra.mxu0 0.0
        %988 = vmatprep.subr.mxu0 0.0
        %989 = vmatpush1.msra.mxu0 0.0
        %990 = vmatprep.subr.mxu0 0.0
        %991 = vmatpush1.msra.mxu0 0.0
        %992 = vmatprep.subr.mxu0 0.0
        %993 = vmatpush1.msra.mxu0 0.0
        %994 = vmatprep.subr.mxu0 0.0
        %995 = vmatpush1.msra.mxu0 0.0
        %996 = vmatprep.subr.mxu0 0.0
        %997 = vmatpush1.msra.mxu0 0.0
        %998 = vmatprep.subr.mxu0 0.0
        %999 = vmatpush1.msra.mxu0 0.0
        %1000 = vmatprep.subr.mxu0 0.0
        %1001 = vmatpush1.msra.mxu0 0.0
        %1002 = vmatprep.subr.mxu0 %v970
        %1003 = vmatpush1.msra.mxu0 %v967
        %1004 = vmatprep.subr.mxu0 0.0
        %1005 = vmatpush2.msra.mxu0 0.0
        %1006 = vmatprep.subr.mxu0 0.0
        %1007 = vmatpush2.msra.mxu0 0.0
        %1008 = vmatprep.subr.mxu0 0.0
        %1009 = vmatpush2.msra.mxu0 0.0
        %1010 = vmatprep.subr.mxu0 0.0
        %1011 = vmatpush2.msra.mxu0 0.0
        %1012 = vmatprep.subr.mxu0 0.0
        %1013 = vmatpush2.msra.mxu0 0.0
        %1014 = vmatprep.subr.mxu0 0.0
        %1015 = vmatpush2.msra.mxu0 0.0
        %1016 = vmatprep.subr.mxu0 0.0
        %1017 = vmatpush2.msra.mxu0 0.0
        %1018 = vmatprep.subr.mxu0 0.0
        %1019 = vmatpush2.msra.mxu0 0.0
        %1020 = vmatprep.subr.mxu0 0.0
        %1021 = vmatpush2.msra.mxu0 0.0
        %1022 = vmatprep.subr.mxu0 0.0
        %1023 = vmatpush2.msra.mxu0 0.0
        %1024 = vmatprep.subr.mxu0 0.0
        %1025 = vmatpush2.msra.mxu0 0.0
        %1026 = vmatprep.subr.mxu0 0.0
        %1027 = vmatpush2.msra.mxu0 0.0
        %1028 = vmatprep.subr.mxu0 0.0
        %1029 = vmatpush2.msra.mxu0 0.0
        %1030 = vmatprep.subr.mxu0 0.0
        %1031 = vmatpush2.msra.mxu0 0.0
        %1032 = vmatprep.subr.mxu0 0.0
        %1033 = vmatpush2.msra.mxu0 0.0
        %1034 = vmatprep.subr.mxu0 0.0
        %1035 = vmatpush2.msra.mxu0 0.0
        %1036 = vmatprep.mubr.f32.mxu0 0.0
        %1037 = vmatmul.mubr.f32.gmra.mxu0 %v964
        %v1038 = vpop.f32.mrf.mxu0
        %v1039 = vadd.f32 0.0, %v1038
        %v1040 = vpop.f32.mrf.mxu0
        %v1041 = vadd.f32 0.0, %v1040
        %1042 = vdwg.mxu0
        %v1043 = vadd.f32 %v939, %v1039
        %v1044 = vadd.f32 %v940, %v1041
        %1045 = vrot.lane.b32.xlu0 %v223, 111
        %v1046 = vpop.permute.xlu0 %1045
        %1047 = vrot.lane.b32.xlu0 %v227, 111
        %v1048 = vpop.permute.xlu0 %1047
        %vm1049 = vcmp.lt.s32.totalorder %v234, 111
        %v1050 = vsel %vm1049, %v1046, %v1048
        %v1051 = vsel %vm1049, %v1048, %v1046
        %vm1052 = vmand %vm842, %vm446
        %v1053 = vsel %vm1052, 1, 0
        %v1054 = vlaneseq
        %v1055 = vshrl.u32 %v1054, 7
        %v1056 = vsub.s32 0, %v1055
        %v1057 = vrot.slane %v1053, %v1056
        %v1058 = vlaneseq
        %v1059 = vshrl.u32 %v1058, 7
        %v1060 = vsub.s32 1, %v1059
        %v1061 = vrot.slane %v1053, %v1060
        %vm1062 = vcmp.eq.s32.totalorder %v1057, 1
        %vm1063 = vcmp.eq.s32.totalorder %v1061, 1
        %v1064 = vsel %vm1062, %v1050, 0.0
        %v1065 = vsel %vm1063, %v1051, 0.0
        %s1066 = scalar_lea.vmem %s1, 32
        %v1067 = vld [vmem:[%s1066] sm:$0xf]
        %v1069 = vsel %vm277, %v1067, 0
        %v1072 = vsel %vm281, %v1064, 0
        %v1075 = vsel %vm281, %v1065, 0
        %1077 = vmatprep.subr.mxu0 0.0
        %1078 = vmatpush1.msra.mxu0 0.0
        %1079 = vmatprep.subr.mxu0 0.0
        %1080 = vmatpush1.msra.mxu0 0.0
        %1081 = vmatprep.subr.mxu0 0.0
        %1082 = vmatpush1.msra.mxu0 0.0
        %1083 = vmatprep.subr.mxu0 0.0
        %1084 = vmatpush1.msra.mxu0 0.0
        %1085 = vmatprep.subr.mxu0 0.0
        %1086 = vmatpush1.msra.mxu0 0.0
        %1087 = vmatprep.subr.mxu0 0.0
        %1088 = vmatpush1.msra.mxu0 0.0
        %1089 = vmatprep.subr.mxu0 0.0
        %1090 = vmatpush1.msra.mxu0 0.0
        %1091 = vmatprep.subr.mxu0 0.0
        %1092 = vmatpush1.msra.mxu0 0.0
        %1093 = vmatprep.subr.mxu0 0.0
        %1094 = vmatpush1.msra.mxu0 0.0
        %1095 = vmatprep.subr.mxu0 0.0
        %1096 = vmatpush1.msra.mxu0 0.0
        %1097 = vmatprep.subr.mxu0 0.0
        %1098 = vmatpush1.msra.mxu0 0.0
        %1099 = vmatprep.subr.mxu0 0.0
        %1100 = vmatpush1.msra.mxu0 0.0
        %1101 = vmatprep.subr.mxu0 0.0
        %1102 = vmatpush1.msra.mxu0 0.0
        %1103 = vmatprep.subr.mxu0 0.0
        %1104 = vmatpush1.msra.mxu0 0.0
        %1105 = vmatprep.subr.mxu0 0.0
        %1106 = vmatpush1.msra.mxu0 0.0
        %1107 = vmatprep.subr.mxu0 %v1075
        %1108 = vmatpush1.msra.mxu0 %v1072
        %1109 = vmatprep.subr.mxu0 0.0
        %1110 = vmatpush2.msra.mxu0 0.0
        %1111 = vmatprep.subr.mxu0 0.0
        %1112 = vmatpush2.msra.mxu0 0.0
        %1113 = vmatprep.subr.mxu0 0.0
        %1114 = vmatpush2.msra.mxu0 0.0
        %1115 = vmatprep.subr.mxu0 0.0
        %1116 = vmatpush2.msra.mxu0 0.0
        %1117 = vmatprep.subr.mxu0 0.0
        %1118 = vmatpush2.msra.mxu0 0.0
        %1119 = vmatprep.subr.mxu0 0.0
        %1120 = vmatpush2.msra.mxu0 0.0
        %1121 = vmatprep.subr.mxu0 0.0
        %1122 = vmatpush2.msra.mxu0 0.0
        %1123 = vmatprep.subr.mxu0 0.0
        %1124 = vmatpush2.msra.mxu0 0.0
        %1125 = vmatprep.subr.mxu0 0.0
        %1126 = vmatpush2.msra.mxu0 0.0
        %1127 = vmatprep.subr.mxu0 0.0
        %1128 = vmatpush2.msra.mxu0 0.0
        %1129 = vmatprep.subr.mxu0 0.0
        %1130 = vmatpush2.msra.mxu0 0.0
        %1131 = vmatprep.subr.mxu0 0.0
        %1132 = vmatpush2.msra.mxu0 0.0
        %1133 = vmatprep.subr.mxu0 0.0
        %1134 = vmatpush2.msra.mxu0 0.0
        %1135 = vmatprep.subr.mxu0 0.0
        %1136 = vmatpush2.msra.mxu0 0.0
        %1137 = vmatprep.subr.mxu0 0.0
        %1138 = vmatpush2.msra.mxu0 0.0
        %1139 = vmatprep.subr.mxu0 0.0
        %1140 = vmatpush2.msra.mxu0 0.0
        %1141 = vmatprep.mubr.f32.mxu0 0.0
        %1142 = vmatmul.mubr.f32.gmra.mxu0 %v1069
        %v1143 = vpop.f32.mrf.mxu0
        %v1144 = vadd.f32 0.0, %v1143
        %v1145 = vpop.f32.mrf.mxu0
        %v1146 = vadd.f32 0.0, %v1145
        %1147 = vdwg.mxu0
        %v1148 = vadd.f32 %v1043, %v1144
        %v1149 = vadd.f32 %v1044, %v1146
        %v1150 = vld [vmem:[%s2] sm:$0xf]
        %1152 = vset.pattern.permute.xlu0 0
        %1153 = vperm.xlu0 %1152, %v1150
        %v1154 = vpop.permute.xlu0 %1153
        %v1156 = vunpack.c.l.s4 839922192
        %v1157 = vunpack.c.0.s8 %v1156
        %v1158 = vlaneseq
        %v1159 = vshrl.u32 %v1158, 7
        %v1160 = vsub.s32 %v1157, %v1159
        %v1161 = vrot.slane %v1154, %v1160
        %v1163 = vadd.f32 %v223, %v1161
        %v1166 = vcombine.low %v1148, %v1149
        %v1168 = vadd.f32 %v1163, %v1166
        %1169 = vst [vmem:[%s217] sm:$0xff] %v1168
        %s1170 = sand.u32 %s137, 1
        %s1171 = scalar_lea.sflag [#allocation3], %s1170
        %s1172 = sand.u32 %s137, 1
        %s1173 = smul.addr %s1172, 8
        %s1174 = scalar_lea.vmem [#allocation2], %s1173
        // Predicated region
        $region41: #{tpu_custom_call.1} parent=39 // pred_check
          %p1175 = pneg %p147
        $region42: #{tpu_custom_call.1} parent=39 // pred_check_branch
          %1177 = sbr.rel (%p1175) target = $region44
        $region43: #{tpu_custom_call.1} parent=39 // pred_region
          %s1179 = ssub.s32 128, 128
          %1180 = vsyncadd %s1171, %s1179
          %s1181 = smul.addr %s19, 2
          %s1182 = smul.addr %s1181, 64
          %s1183 = scalar_lea.hbm %s5, %s1182
          %s1185 = sshll.u32 %s1174, 4
          %s1186 = int_to_ptr.vmem [resolvable:$true] %s1185
          %1188 = dma.vmem_to_hbm [thread:$0]  %s1186, 128, %s1183, %s1171
        $region44: #{tpu_custom_call.1} parent=39 // pred_fallthru
          _
      $region40: #{tpu_custom_call.1} parent=5 // pred_fallthru
        _
      %p1189 = scmp.le.s32.totalorder 2, %s14
      // Predicated region
      $region45: #{tpu_custom_call.1} parent=5 // pred_check
        %p1190 = pneg %p1189
      $region46: #{tpu_custom_call.1} parent=5 // pred_check_branch
        %1192 = sbr.rel (%p1190) target = $region48
      $region47: #{tpu_custom_call.1} parent=5 // pred_region
        %s1193 = ssub.s32 %s14, 2
        // Predicated region
        $region49: #{tpu_custom_call.1} parent=47 // pred_check
          %p1194 = pneg %p153
        $region50: #{tpu_custom_call.1} parent=47 // pred_check_branch
          %1196 = sbr.rel (%p1194) target = $region52
        $region51: #{tpu_custom_call.1} parent=47 // pred_region
          %s1197 = sand.u32 %s138, 1
          %s1198 = scalar_lea.sflag [#allocation3], %s1197
          %s1199 = sand.u32 %s138, 1
          %s1200 = smul.addr %s1199, 8
          %s1201 = scalar_lea.vmem [#allocation2], %s1200
          %1202 = dma.done %s1198, 128
        $region52: #{tpu_custom_call.1} parent=47 // pred_fallthru
          _
      $region48: #{tpu_custom_call.1} parent=5 // pred_fallthru
        _
    $region6: #{tpu_custom_call.1} parent=1 // loop_footer
      %s18 = sadd.s32 1, %s14
    $region7: #{tpu_custom_call.1} parent=1 // loop_footer_branch
      %13 = sbr.rel target = $region3
    $region8: #{tpu_custom_call.1} parent=1 // loop_exit
      _
    %1203 = vsyncpa [#allocation3], 1
    %s1204 = scalar_lea.sflag [#allocation3], 1
    %1205 = vsyncpa %s1204, 1

</llo_original>
